<compile_context>
chip_gen: v5e
topology: v5e:2x2
jax: 0.10.0
libtpu: 0.0.40
codegen_flags: <defaults>
</compile_context>

<pallas_src>
import functools

import jax
import jax.numpy as jnp
from jax.experimental import pallas as pl
from jax.experimental.pallas import tpu as pltpu


def _seg_layernorm(x, aavg, gamma, beta, eps=1e-5):
    """LayerNorm over each 32-lane group of a [rows, T*V] tile.

    `aavg` = kron(I_T, ones(V,V)/V): a matmul with it yields the per-group mean
    already broadcast across the group's lanes, so the reduction lands on the
    MXU and the whole pipeline stays lane-dense.
    """
    mean = jnp.dot(x, aavg, preferred_element_type=jnp.float32)
    xc = x - mean
    var = jnp.dot(xc * xc, aavg, preferred_element_type=jnp.float32)
    return xc * jax.lax.rsqrt(var + eps) * gamma + beta


def patch_mab_kernel(q_ref, wq_ref, bq_ref, wp_ref, bp_ref, wo_ref, bo_ref,
                     aavg_ref, g0_ref, b0_ref, g1_ref, b1_ref, out_ref, *,
                     ln, tb, g, s, tv):
    rows = tb * s            # packed rows per grid step: (batch-in-block, seg_num)
    grows = g * s            # rows per fc_patch chunk (g*S <= 128)
    # [TB, S, T*D] block -> [TB*S, T*D]; leading-dim merge only (layout-safe).
    x = q_ref[...].reshape(rows, tv).astype(jnp.float32)

    # fc_q: lane-dense [rows, 128] @ [128, 128] (block-diagonal kron(I_T, Wq.T)).
    q1 = jnp.dot(x, wq_ref[...], preferred_element_type=jnp.float32) + bq_ref[...]

    # fc_patch mixes only the seg_num (row) axis, so in the packed layout it is a
    # plain left-multiply by Wp.  Batches are chunked so each chunk is a single
    # full-depth MXU pass with blockdiag(Wp, g) (at most [128, 128]).
    if tb == g:
        o = jnp.dot(wp_ref[...], q1, preferred_element_type=jnp.float32)
    else:
        parts = []
        for c in range(tb // g):
            parts.append(jnp.dot(wp_ref[...],
                                 q1[c * grows:(c + 1) * grows, :],
                                 preferred_element_type=jnp.float32))
        o = jnp.concatenate(parts, axis=0)
    o = o + bp_ref[...]

    if ln:
        o = _seg_layernorm(o, aavg_ref[...], g0_ref[...], b0_ref[...])

    # fc_o + ReLU + residual with Q_r (requires dim_Q == dim_V, as in the module).
    o = x + jax.nn.relu(
        jnp.dot(o, wo_ref[...], preferred_element_type=jnp.float32) + bo_ref[...])

    if ln:
        o = _seg_layernorm(o, aavg_ref[...], g1_ref[...], b1_ref[...])

    out_ref[...] = o.reshape(tb, s, tv).astype(out_ref.dtype)


def _vmem_capacity_bytes():
    try:
        info = pltpu.get_tpu_info()
        cap = getattr(info, "vmem_capacity_bytes", None)
        if cap:
            return int(cap)
    except Exception:
        pass
    return 128 * 1024 * 1024


def _tiling_plan(batch, s, tv, itemsize=4):
    """Pick (tb, vmem_limit_bytes), both derived from the chip's VMEM capacity.

    v5e/v6e (single TensorCore, 128 MiB VMEM): fewest possible grid steps with
    large blocks (per-step overhead ~0.35 us dwarfs sub-us compute).  v7x-class
    (2 TensorCores, 64 MiB VMEM per core): keep >= 2 (ideally 4) parallel steps
    and a tighter per-block footprint / VMEM limit.
    """
    cap = _vmem_capacity_bytes()
    small_vmem = cap <= 96 * 1024 * 1024             # v7x-class core
    vmem_limit = min(cap // 2, 64 * 1024 * 1024)     # 32 MiB on v7x, 64 MiB else
    if small_vmem:
        block_budget = 8 * 1024 * 1024
        min_steps = min(batch, 4)                    # 2 steps per TensorCore
    else:
        block_budget = 32 * 1024 * 1024
        min_steps = 1
    per_b = s * tv * itemsize * 2 * 2                # in+out blocks, x2 double-buffer
    tb = 1
    for cand in range(1, batch + 1):
        if batch % cand:
            continue
        if batch // cand < min_steps:
            continue
        if cand * per_b > block_budget:
            continue
        tb = cand
    return tb, vmem_limit


def _largest_divisor_leq(n, cap):
    best = 1
    for d in range(1, min(n, cap) + 1):
        if n % d == 0:
            best = d
    return best


def patch_mab_forward(Q, params, ln=True, tb=None):
    b, S, T, D = Q.shape
    V, Dq = params["wq"].shape
    assert Dq == D
    assert D == V, "residual add in patchMAB requires dim_Q == dim_V"
    TV = T * V

    auto_tb, vmem_limit = _tiling_plan(b, S, TV, jnp.dtype(Q.dtype).itemsize)
    if tb is None:
        tb = auto_tb
    assert b % tb == 0
    # fc_patch chunk size: largest divisor of tb with g*S <= 128 rows.
    g = _largest_divisor_leq(tb, max(1, 128 // S))

    # Lane-dense packed view: (b, seg_num, ts_d*d_model) = (b, 8, 128).
    # Contiguous reshape -- no HBM transpose.
    Qf = Q.reshape(b, S, TV)

    f32 = jnp.float32
    eyeT = jnp.eye(T, dtype=f32)
    # fc_q / fc_o act per (ts_d, d_model) 32-lane chunk -> block-diag [128, 128].
    wq_bd = jnp.kron(eyeT, params["wq"].T.astype(f32))                 # [T*D, T*V]
    wo_bd = jnp.kron(eyeT, params["wo"].T.astype(f32))                 # [T*V, T*V]
    bq_t = jnp.tile(params["bq"].astype(f32), T).reshape(1, TV)
    bo_t = jnp.tile(params["bo"].astype(f32), T).reshape(1, TV)
    # fc_patch left-multiplies the seg_num rows; blockdiag over a g-batch chunk.
    wp_bd = jnp.kron(jnp.eye(g, dtype=f32), params["wp"].astype(f32))  # [g*S, g*S]
    bp_r = jnp.tile(params["bp"].astype(f32), tb).reshape(tb * S, 1)
    # Segment-average matrix for the per-32-lane-group LayerNorms.
    aavg = jnp.kron(eyeT, jnp.full((V, V), 1.0 / V, dtype=f32))        # [T*V, T*V]
    g0t = jnp.tile(params["g0"].astype(f32), T).reshape(1, TV)
    b0t = jnp.tile(params["b0"].astype(f32), T).reshape(1, TV)
    g1t = jnp.tile(params["g1"].astype(f32), T).reshape(1, TV)
    b1t = jnp.tile(params["b1"].astype(f32), T).reshape(1, TV)

    def full(shape):
        return pl.BlockSpec(shape, lambda i, _n=len(shape): (0,) * _n)

    out = pl.pallas_call(
        functools.partial(patch_mab_kernel, ln=ln, tb=tb, g=g, s=S, tv=TV),
        out_shape=jax.ShapeDtypeStruct((b, S, TV), Q.dtype),
        grid=(b // tb,),
        in_specs=[
            pl.BlockSpec((tb, S, TV), lambda i: (i, 0, 0)),  # Q slab per step
            full((TV, TV)), full((1, TV)),                   # fc_q (block-diag)
            full((g * S, g * S)), full((tb * S, 1)),         # fc_patch
            full((TV, TV)), full((1, TV)),                   # fc_o (block-diag)
            full((TV, TV)),                                  # LN segment average
            full((1, TV)), full((1, TV)),                    # ln0 gamma/beta
            full((1, TV)), full((1, TV)),                    # ln1 gamma/beta
        ],
        out_specs=pl.BlockSpec((tb, S, TV), lambda i: (i, 0, 0)),
        compiler_params=pltpu.CompilerParams(
            dimension_semantics=("parallel",),
            vmem_limit_bytes=vmem_limit),
    )(Qf, wq_bd, bq_t, wp_bd, bp_r, wo_bd, bo_t, aavg, g0t, b0t, g1t, b1t)

    # Free reshape into the module's output layout [b, seg_num, ts_d, d_model].
    return out.reshape(b, S, T, V)


def _layernorm_ref(x, gamma, beta, eps=1e-5):
    mean = jnp.mean(x, axis=-1, keepdims=True)
    var = jnp.mean((x - mean) ** 2, axis=-1, keepdims=True)
    return (x - mean) * jax.lax.rsqrt(var + eps) * gamma + beta


def patch_mab_reference(Q, params, ln=True):
    """Literal JAX port of the PyTorch forward (with the einops transposes)."""
    b, S, T, D = Q.shape
    Qr = jnp.transpose(Q, (0, 2, 1, 3)).reshape(b * T, S, D)
    q1 = Qr @ params["wq"].T + params["bq"]                   # fc_q
    qt = jnp.swapaxes(q1, -1, -2)                             # [BT, V, S]
    o = qt @ params["wp"].T + params["bp"]                    # fc_patch along seg_num
    o = jnp.swapaxes(o, -1, -2)                               # [BT, S, V]
    if ln:
        o = _layernorm_ref(o, params["g0"], params["b0"])
    o = Qr + jax.nn.relu(o @ params["wo"].T + params["bo"])   # fc_o + relu + residual
    if ln:
        o = _layernorm_ref(o, params["g1"], params["b1"])
    return jnp.transpose(o.reshape(b, T, S, -1), (0, 2, 1, 3))


def make_params(key, dim_Q, dim_V, len_in):
    ks = jax.random.split(key, 6)
    scale = 0.1
    return {
        "wq": scale * jax.random.normal(ks[0], (dim_V, dim_Q), jnp.float32),
        "bq": scale * jax.random.normal(ks[1], (dim_V,), jnp.float32),
        "wp": scale * jax.random.normal(ks[2], (len_in, len_in), jnp.float32),
        "bp": scale * jax.random.normal(ks[3], (len_in,), jnp.float32),
        "wo": scale * jax.random.normal(ks[4], (dim_V, dim_V), jnp.float32),
        "bo": scale * jax.random.normal(ks[5], (dim_V,), jnp.float32),
        "g0": jnp.ones((dim_V,), jnp.float32),
        "b0": jnp.zeros((dim_V,), jnp.float32),
        "g1": jnp.ones((dim_V,), jnp.float32),
        "b1": jnp.zeros((dim_V,), jnp.float32),
    }


if __name__ == "__main__":
    # patchMAB(dim_Q=32, dim_V=32, len_in=8, num_heads=4, ln=True)
    # (dim_Q must equal dim_V for the residual add; num_heads is unused in forward.)
    seg_num, ts_d, d_model = 8, 4, 32
    dim_Q = dim_V = d_model
    len_in = seg_num

    key = jax.random.PRNGKey(0)
    k_q, k_p, k_q2, k_q3 = jax.random.split(key, 4)
    params = make_params(k_p, dim_Q, dim_V, len_in)

    def check(Q, **kw):
        out = jax.block_until_ready(patch_mab_forward(Q, params, ln=True, **kw))
        ref = patch_mab_reference(Q, params, ln=True)
        assert out.shape == Q.shape[:3] + (dim_V,), out.shape
        assert jnp.allclose(out, ref, atol=1e-4, rtol=1e-4), float(
            jnp.max(jnp.abs(out - ref)))

    # Case 1: small batch (auto tb, chip-aware grid).
    Q = jax.random.normal(k_q, (2, seg_num, ts_d, d_model), jnp.float32)
    check(Q)

    # Case 2: batch=8, auto tb (single step on v5e/v6e, >=4 steps on v7x).
    Q2 = jax.random.normal(k_q2, (8, seg_num, ts_d, d_model), jnp.float32)
    check(Q2)

    # Case 3: batch=64 with forced tb=32 exercises the chunked fc_patch path.
    Q3 = jax.random.normal(k_q3, (64, seg_num, ts_d, d_model), jnp.float32)
    check(Q3, tb=32)

    print("KERNEL_OK")
</pallas_src>

<mosaic_0001>
module attributes {stable_mosaic.version = 11 : i64} {
  func.func @patch_mab_kernel(%arg0: i32, %arg1: memref<2x8x128xf32, #tpu.memory_space<vmem>>, %arg2: memref<128x128xf32, #tpu.memory_space<vmem>>, %arg3: memref<1x128xf32, #tpu.memory_space<vmem>>, %arg4: memref<16x16xf32, #tpu.memory_space<vmem>>, %arg5: memref<16x1xf32, #tpu.memory_space<vmem>>, %arg6: memref<128x128xf32, #tpu.memory_space<vmem>>, %arg7: memref<1x128xf32, #tpu.memory_space<vmem>>, %arg8: memref<128x128xf32, #tpu.memory_space<vmem>>, %arg9: memref<1x128xf32, #tpu.memory_space<vmem>>, %arg10: memref<1x128xf32, #tpu.memory_space<vmem>>, %arg11: memref<1x128xf32, #tpu.memory_space<vmem>>, %arg12: memref<1x128xf32, #tpu.memory_space<vmem>>, %arg13: memref<2x8x128xf32, #tpu.memory_space<vmem>>) attributes {dimension_semantics = [#tpu.dimension_semantics<parallel>], iteration_bounds = array<i64: 1>, scalar_prefetch = 0 : i64, scratch_operands = 0 : i64, tpu.core_type = #tpu.core_type<tc>, window_params = [{transform_indices = @transform_0, window_bounds = array<i64: 2, 8, 128>}, {pipeline_mode = #tpu.pipeline_mode<synchronous>, transform_indices = @transform_1, window_bounds = array<i64: 128, 128>}, {pipeline_mode = #tpu.pipeline_mode<synchronous>, transform_indices = @transform_2, window_bounds = array<i64: 1, 128>}, {pipeline_mode = #tpu.pipeline_mode<synchronous>, transform_indices = @transform_3, window_bounds = array<i64: 16, 16>}, {pipeline_mode = #tpu.pipeline_mode<synchronous>, transform_indices = @transform_4, window_bounds = array<i64: 16, 1>}, {pipeline_mode = #tpu.pipeline_mode<synchronous>, transform_indices = @transform_5, window_bounds = array<i64: 128, 128>}, {pipeline_mode = #tpu.pipeline_mode<synchronous>, transform_indices = @transform_6, window_bounds = array<i64: 1, 128>}, {pipeline_mode = #tpu.pipeline_mode<synchronous>, transform_indices = @transform_7, window_bounds = array<i64: 128, 128>}, {pipeline_mode = #tpu.pipeline_mode<synchronous>, transform_indices = @transform_8, window_bounds = array<i64: 1, 128>}, {pipeline_mode = #tpu.pipeline_mode<synchronous>, transform_indices = @transform_9, window_bounds = array<i64: 1, 128>}, {pipeline_mode = #tpu.pipeline_mode<synchronous>, transform_indices = @transform_10, window_bounds = array<i64: 1, 128>}, {pipeline_mode = #tpu.pipeline_mode<synchronous>, transform_indices = @transform_11, window_bounds = array<i64: 1, 128>}, {transform_indices = @transform_12, window_bounds = array<i64: 2, 8, 128>}]} {
    %c0 = arith.constant 0 : index
    %c0_0 = arith.constant 0 : index
    %c0_1 = arith.constant 0 : index
    %0 = vector.load %arg1[%c0, %c0_0, %c0_1] : memref<2x8x128xf32, #tpu.memory_space<vmem>>, vector<2x8x128xf32>
    %1 = vector.shape_cast %0 : vector<2x8x128xf32> to vector<16x128xf32>
    %c0_2 = arith.constant 0 : index
    %c0_3 = arith.constant 0 : index
    %2 = vector.load %arg2[%c0_2, %c0_3] : memref<128x128xf32, #tpu.memory_space<vmem>>, vector<128x128xf32>
    %cst = arith.constant dense<0.000000e+00> : vector<16x128xf32>
    %3 = tpu.matmul %1, %2, %cst {dimension_numbers = #tpu.dot_dimension_numbers<[1], [0], [0], [1], [0, 0, 1, 1], [], []>} : vector<16x128xf32>, vector<128x128xf32>, vector<16x128xf32> -> vector<16x128xf32>
    %c0_4 = arith.constant 0 : index
    %c0_5 = arith.constant 0 : index
    %4 = vector.load %arg3[%c0_4, %c0_5] : memref<1x128xf32, #tpu.memory_space<vmem>>, vector<1x128xf32>
    %5 = vector.broadcast %4 : vector<1x128xf32> to vector<16x128xf32>
    %6 = arith.addf %3, %5 : vector<16x128xf32>
    %c0_6 = arith.constant 0 : index
    %c0_7 = arith.constant 0 : index
    %7 = vector.load %arg4[%c0_6, %c0_7] : memref<16x16xf32, #tpu.memory_space<vmem>>, vector<16x16xf32>
    %cst_8 = arith.constant dense<0.000000e+00> : vector<16x128xf32>
    %8 = tpu.matmul %7, %6, %cst_8 {dimension_numbers = #tpu.dot_dimension_numbers<[1], [0], [0], [1], [0, 0, 1, 1], [], []>} : vector<16x16xf32>, vector<16x128xf32>, vector<16x128xf32> -> vector<16x128xf32>
    %c0_9 = arith.constant 0 : index
    %c0_10 = arith.constant 0 : index
    %9 = vector.load %arg5[%c0_9, %c0_10] : memref<16x1xf32, #tpu.memory_space<vmem>>, vector<16x1xf32>
    %10 = vector.broadcast %9 : vector<16x1xf32> to vector<16x128xf32>
    %11 = arith.addf %8, %10 : vector<16x128xf32>
    %c0_11 = arith.constant 0 : index
    %c0_12 = arith.constant 0 : index
    %12 = vector.load %arg8[%c0_11, %c0_12] : memref<128x128xf32, #tpu.memory_space<vmem>>, vector<128x128xf32>
    %c0_13 = arith.constant 0 : index
    %c0_14 = arith.constant 0 : index
    %13 = vector.load %arg9[%c0_13, %c0_14] : memref<1x128xf32, #tpu.memory_space<vmem>>, vector<1x128xf32>
    %c0_15 = arith.constant 0 : index
    %c0_16 = arith.constant 0 : index
    %14 = vector.load %arg10[%c0_15, %c0_16] : memref<1x128xf32, #tpu.memory_space<vmem>>, vector<1x128xf32>
    %cst_17 = arith.constant dense<0.000000e+00> : vector<16x128xf32>
    %15 = tpu.matmul %11, %12, %cst_17 {dimension_numbers = #tpu.dot_dimension_numbers<[1], [0], [0], [1], [0, 0, 1, 1], [], []>} : vector<16x128xf32>, vector<128x128xf32>, vector<16x128xf32> -> vector<16x128xf32>
    %16 = arith.subf %11, %15 : vector<16x128xf32>
    %17 = arith.mulf %16, %16 : vector<16x128xf32>
    %cst_18 = arith.constant dense<0.000000e+00> : vector<16x128xf32>
    %18 = tpu.matmul %17, %12, %cst_18 {dimension_numbers = #tpu.dot_dimension_numbers<[1], [0], [0], [1], [0, 0, 1, 1], [], []>} : vector<16x128xf32>, vector<128x128xf32>, vector<16x128xf32> -> vector<16x128xf32>
    %cst_19 = arith.constant 9.99999974E-6 : f32
    %19 = vector.broadcast %cst_19 : f32 to vector<16x128xf32>
    %20 = arith.addf %18, %19 : vector<16x128xf32>
    %21 = math.rsqrt %20 : vector<16x128xf32>
    %22 = arith.mulf %16, %21 : vector<16x128xf32>
    %23 = vector.broadcast %13 : vector<1x128xf32> to vector<16x128xf32>
    %24 = arith.mulf %22, %23 : vector<16x128xf32>
    %25 = vector.broadcast %14 : vector<1x128xf32> to vector<16x128xf32>
    %26 = arith.addf %24, %25 : vector<16x128xf32>
    %c0_20 = arith.constant 0 : index
    %c0_21 = arith.constant 0 : index
    %27 = vector.load %arg6[%c0_20, %c0_21] : memref<128x128xf32, #tpu.memory_space<vmem>>, vector<128x128xf32>
    %cst_22 = arith.constant dense<0.000000e+00> : vector<16x128xf32>
    %28 = tpu.matmul %26, %27, %cst_22 {dimension_numbers = #tpu.dot_dimension_numbers<[1], [0], [0], [1], [0, 0, 1, 1], [], []>} : vector<16x128xf32>, vector<128x128xf32>, vector<16x128xf32> -> vector<16x128xf32>
    %c0_23 = arith.constant 0 : index
    %c0_24 = arith.constant 0 : index
    %29 = vector.load %arg7[%c0_23, %c0_24] : memref<1x128xf32, #tpu.memory_space<vmem>>, vector<1x128xf32>
    %30 = vector.broadcast %29 : vector<1x128xf32> to vector<16x128xf32>
    %31 = arith.addf %28, %30 : vector<16x128xf32>
    %cst_25 = arith.constant 0.000000e+00 : f32
    %32 = vector.broadcast %cst_25 : f32 to vector<16x128xf32>
    %33 = arith.maximumf %31, %32 : vector<16x128xf32>
    %34 = arith.addf %1, %33 : vector<16x128xf32>
    %c0_26 = arith.constant 0 : index
    %c0_27 = arith.constant 0 : index
    %35 = vector.load %arg8[%c0_26, %c0_27] : memref<128x128xf32, #tpu.memory_space<vmem>>, vector<128x128xf32>
    %c0_28 = arith.constant 0 : index
    %c0_29 = arith.constant 0 : index
    %36 = vector.load %arg11[%c0_28, %c0_29] : memref<1x128xf32, #tpu.memory_space<vmem>>, vector<1x128xf32>
    %c0_30 = arith.constant 0 : index
    %c0_31 = arith.constant 0 : index
    %37 = vector.load %arg12[%c0_30, %c0_31] : memref<1x128xf32, #tpu.memory_space<vmem>>, vector<1x128xf32>
    %cst_32 = arith.constant dense<0.000000e+00> : vector<16x128xf32>
    %38 = tpu.matmul %34, %35, %cst_32 {dimension_numbers = #tpu.dot_dimension_numbers<[1], [0], [0], [1], [0, 0, 1, 1], [], []>} : vector<16x128xf32>, vector<128x128xf32>, vector<16x128xf32> -> vector<16x128xf32>
    %39 = arith.subf %34, %38 : vector<16x128xf32>
    %40 = arith.mulf %39, %39 : vector<16x128xf32>
    %cst_33 = arith.constant dense<0.000000e+00> : vector<16x128xf32>
    %41 = tpu.matmul %40, %35, %cst_33 {dimension_numbers = #tpu.dot_dimension_numbers<[1], [0], [0], [1], [0, 0, 1, 1], [], []>} : vector<16x128xf32>, vector<128x128xf32>, vector<16x128xf32> -> vector<16x128xf32>
    %cst_34 = arith.constant 9.99999974E-6 : f32
    %42 = vector.broadcast %cst_34 : f32 to vector<16x128xf32>
    %43 = arith.addf %41, %42 : vector<16x128xf32>
    %44 = math.rsqrt %43 : vector<16x128xf32>
    %45 = arith.mulf %39, %44 : vector<16x128xf32>
    %46 = vector.broadcast %36 : vector<1x128xf32> to vector<16x128xf32>
    %47 = arith.mulf %45, %46 : vector<16x128xf32>
    %48 = vector.broadcast %37 : vector<1x128xf32> to vector<16x128xf32>
    %49 = arith.addf %47, %48 : vector<16x128xf32>
    %50 = vector.shape_cast %49 : vector<16x128xf32> to vector<2x8x128xf32>
    %c0_35 = arith.constant 0 : index
    %c0_36 = arith.constant 0 : index
    %c0_37 = arith.constant 0 : index
    %51 = vector.load %arg13[%c0_35, %c0_36, %c0_37] : memref<2x8x128xf32, #tpu.memory_space<vmem>>, vector<2x8x128xf32>
    tpu.vector_store %arg13[%c0_35, %c0_36, %c0_37], %50 {strides = array<i32>} : memref<2x8x128xf32, #tpu.memory_space<vmem>>, vector<2x8x128xf32>,
    return
  }
  func.func @transform_0(%arg0: i32) -> (i32, i32, i32) {
    %c0_i32 = arith.constant 0 : i32
    %c0_i32_0 = arith.constant 0 : i32
    %c0_i32_1 = arith.constant 0 : i32
    return %arg0, %c0_i32, %c0_i32_0 : i32, i32, i32
  }
  func.func @transform_1(%arg0: i32) -> (i32, i32) {
    %c0_i32 = arith.constant 0 : i32
    %c0_i32_0 = arith.constant 0 : i32
    %c0_i32_1 = arith.constant 0 : i32
    return %c0_i32, %c0_i32_0 : i32, i32
  }
  func.func @transform_2(%arg0: i32) -> (i32, i32) {
    %c0_i32 = arith.constant 0 : i32
    %c0_i32_0 = arith.constant 0 : i32
    %c0_i32_1 = arith.constant 0 : i32
    return %c0_i32, %c0_i32_0 : i32, i32
  }
  func.func @transform_3(%arg0: i32) -> (i32, i32) {
    %c0_i32 = arith.constant 0 : i32
    %c0_i32_0 = arith.constant 0 : i32
    %c0_i32_1 = arith.constant 0 : i32
    return %c0_i32, %c0_i32_0 : i32, i32
  }
  func.func @transform_4(%arg0: i32) -> (i32, i32) {
    %c0_i32 = arith.constant 0 : i32
    %c0_i32_0 = arith.constant 0 : i32
    %c0_i32_1 = arith.constant 0 : i32
    return %c0_i32, %c0_i32_0 : i32, i32
  }
  func.func @transform_5(%arg0: i32) -> (i32, i32) {
    %c0_i32 = arith.constant 0 : i32
    %c0_i32_0 = arith.constant 0 : i32
    %c0_i32_1 = arith.constant 0 : i32
    return %c0_i32, %c0_i32_0 : i32, i32
  }
  func.func @transform_6(%arg0: i32) -> (i32, i32) {
    %c0_i32 = arith.constant 0 : i32
    %c0_i32_0 = arith.constant 0 : i32
    %c0_i32_1 = arith.constant 0 : i32
    return %c0_i32, %c0_i32_0 : i32, i32
  }
  func.func @transform_7(%arg0: i32) -> (i32, i32) {
    %c0_i32 = arith.constant 0 : i32
    %c0_i32_0 = arith.constant 0 : i32
    %c0_i32_1 = arith.constant 0 : i32
    return %c0_i32, %c0_i32_0 : i32, i32
  }
  func.func @transform_8(%arg0: i32) -> (i32, i32) {
    %c0_i32 = arith.constant 0 : i32
    %c0_i32_0 = arith.constant 0 : i32
    %c0_i32_1 = arith.constant 0 : i32
    return %c0_i32, %c0_i32_0 : i32, i32
  }
  func.func @transform_9(%arg0: i32) -> (i32, i32) {
    %c0_i32 = arith.constant 0 : i32
    %c0_i32_0 = arith.constant 0 : i32
    %c0_i32_1 = arith.constant 0 : i32
    return %c0_i32, %c0_i32_0 : i32, i32
  }
  func.func @transform_10(%arg0: i32) -> (i32, i32) {
    %c0_i32 = arith.constant 0 : i32
    %c0_i32_0 = arith.constant 0 : i32
    %c0_i32_1 = arith.constant 0 : i32
    return %c0_i32, %c0_i32_0 : i32, i32
  }
  func.func @transform_11(%arg0: i32) -> (i32, i32) {
    %c0_i32 = arith.constant 0 : i32
    %c0_i32_0 = arith.constant 0 : i32
    %c0_i32_1 = arith.constant 0 : i32
    return %c0_i32, %c0_i32_0 : i32, i32
  }
  func.func @transform_12(%arg0: i32) -> (i32, i32, i32) {
    %c0_i32 = arith.constant 0 : i32
    %c0_i32_0 = arith.constant 0 : i32
    %c0_i32_1 = arith.constant 0 : i32
    return %arg0, %c0_i32, %c0_i32_0 : i32, i32, i32
  }
}

</mosaic_0001>

<llo_original>
// kernel: tpu_custom_call.1
$region0: #{tpu_custom_call.1}
  #allocation0 [shape = 'u32[]', space=smem, size = 0x4, offset = 0x4, fixed_abs, tag = 'smem constant byte address 0x4 - core index']
  #allocation1 [shape = 'u32[72,128]{1,0:T(1,128)}', space=vmem, size = 0x9000, scoped, tag = 'internal scratch']
  %s0 = inlined_call_operand.vmem [shape: f32[2,8,128], index: 0, kind: input, shape index: {}]
  %s1 = inlined_call_operand.hbm [shape: f32[128,128], index: 1, kind: input, shape index: {}]
  %s2 = inlined_call_operand.vmem [shape: f32[1,128], index: 2, kind: input, shape index: {}]
  %s3 = inlined_call_operand.hbm [shape: f32[16,16], index: 3, kind: input, shape index: {}]
  %s4 = inlined_call_operand.vmem [shape: f32[16,1], index: 4, kind: input, shape index: {}]
  %s5 = inlined_call_operand.hbm [shape: f32[128,128], index: 5, kind: input, shape index: {}]
  %s6 = inlined_call_operand.vmem [shape: f32[1,128], index: 6, kind: input, shape index: {}]
  %s7 = inlined_call_operand.hbm [shape: f32[128,128], index: 7, kind: input, shape index: {}]
  %s8 = inlined_call_operand.vmem [shape: f32[1,128], index: 8, kind: input, shape index: {}]
  %s9 = inlined_call_operand.vmem [shape: f32[1,128], index: 9, kind: input, shape index: {}]
  %s10 = inlined_call_operand.vmem [shape: f32[1,128], index: 10, kind: input, shape index: {}]
  %s11 = inlined_call_operand.vmem [shape: f32[1,128], index: 11, kind: input, shape index: {}]
  %s12 = inlined_call_operand.hbm [shape: f32[2,8,128], index: 12, kind: output, shape index: {}]
  %s13 = sld [smem:[#allocation0]]
  $region74: #{tpu_custom_call.1} parent=0
    _
  %s15 = ssub.s32 1, %s13
  %s16 = scalar_select 0, %s15, %s13
  $region1: #{tpu_custom_call.1} parent=0
    #allocation2 [shape = 'u8[65536]{0}', space=vmem, size = 0x10000, scoped, tag = 'input window, operand 1, single buffered']
    #allocation3 [shape = 's32[1]{0}', space=sflag, size = 0x4, scoped, tag = 'scoped memory for tpu_custom_call.1']
    #allocation4 [shape = 's32[1]{0}', space=sflag, size = 0x4, scoped, tag = 'scoped memory for tpu_custom_call.1']
    #allocation5 [shape = 'u8[8192]{0}', space=vmem, size = 0x2000, scoped, tag = 'input window, operand 3, single buffered']
    #allocation6 [shape = 's32[1]{0}', space=sflag, size = 0x4, scoped, tag = 'scoped memory for tpu_custom_call.1']
    #allocation7 [shape = 'u8[65536]{0}', space=vmem, size = 0x10000, scoped, tag = 'input window, operand 5, single buffered']
    #allocation8 [shape = 'u8[65536]{0}', space=vmem, size = 0x10000, scoped, tag = 'input window, operand 7, single buffered']
    #allocation9 [shape = 's32[1]{0}', space=sflag, size = 0x4, scoped, tag = 'scoped memory for tpu_custom_call.1']
    #allocation10 [shape = 'u8[8192]{0}', space=vmem, size = 0x2000, scoped, tag = 'output window, operand 0, single buffered']
    %17 = vsyncpa [#allocation3], 0
    %18 = vsyncpa [#allocation6], 0
    %19 = vsyncpa [#allocation9], 0
    %20 = vsyncpa [#allocation4], 0
    // Predicated region
    $region2: #{tpu_custom_call.1} parent=1 // pred_check
      _
    $region3: #{tpu_custom_call.1} parent=1 // pred_check_branch
      %22 = sbr.rel (0) target = $region5
    $region4: #{tpu_custom_call.1} parent=1 // pred_region
      _
    $region5: #{tpu_custom_call.1} parent=1 // pred_fallthru
      _
    // Predicated region
    $region6: #{tpu_custom_call.1} parent=1 // pred_check
      _
    $region7: #{tpu_custom_call.1} parent=1 // pred_check_branch
      %24 = sbr.rel (0) target = $region9
    $region8: #{tpu_custom_call.1} parent=1 // pred_region
      %26 = vsyncadd [#allocation3], 0
      %s27 = sshll.u32 %s1, 4
      %s28 = int_to_ptr.hbm [resolvable:$true] %s27
      %s29 = sshll.u32 [#allocation2], 4
      %s30 = int_to_ptr.vmem [resolvable:$true] %s29
      %35 = dma.hbm_to_vmem [thread:$0]  %s28, 2048, %s30, [#allocation3], 128, 128, 8
    $region9: #{tpu_custom_call.1} parent=1 // pred_fallthru
      _
    // Predicated region
    $region10: #{tpu_custom_call.1} parent=1 // pred_check
      _
    $region11: #{tpu_custom_call.1} parent=1 // pred_check_branch
      %37 = sbr.rel (0) target = $region13
    $region12: #{tpu_custom_call.1} parent=1 // pred_region
      _
    $region13: #{tpu_custom_call.1} parent=1 // pred_fallthru
      _
    // Predicated region
    $region14: #{tpu_custom_call.1} parent=1 // pred_check
      _
    $region15: #{tpu_custom_call.1} parent=1 // pred_check_branch
      %39 = sbr.rel (0) target = $region17
    $region16: #{tpu_custom_call.1} parent=1 // pred_region
      %41 = vsyncadd [#allocation6], 0
      %s42 = sshll.u32 %s3, 4
      %s43 = int_to_ptr.hbm [resolvable:$true] %s42
      %s44 = sshll.u32 [#allocation5], 4
      %s45 = int_to_ptr.vmem [resolvable:$true] %s44
      %50 = dma.hbm_to_vmem [thread:$0]  %s43, 256, %s45, [#allocation6], 128, 128, 8
    $region17: #{tpu_custom_call.1} parent=1 // pred_fallthru
      _
    // Predicated region
    $region18: #{tpu_custom_call.1} parent=1 // pred_check
      _
    $region19: #{tpu_custom_call.1} parent=1 // pred_check_branch
      %52 = sbr.rel (0) target = $region21
    $region20: #{tpu_custom_call.1} parent=1 // pred_region
      _
    $region21: #{tpu_custom_call.1} parent=1 // pred_fallthru
      _
    // Predicated region
    $region22: #{tpu_custom_call.1} parent=1 // pred_check
      _
    $region23: #{tpu_custom_call.1} parent=1 // pred_check_branch
      %54 = sbr.rel (0) target = $region25
    $region24: #{tpu_custom_call.1} parent=1 // pred_region
      %56 = vsyncadd [#allocation6], 0
      %s57 = sshll.u32 %s5, 4
      %s58 = int_to_ptr.hbm [resolvable:$true] %s57
      %s59 = sshll.u32 [#allocation7], 4
      %s60 = int_to_ptr.vmem [resolvable:$true] %s59
      %65 = dma.hbm_to_vmem [thread:$0]  %s58, 2048, %s60, [#allocation6], 128, 128, 8
    $region25: #{tpu_custom_call.1} parent=1 // pred_fallthru
      _
    // Predicated region
    $region26: #{tpu_custom_call.1} parent=1 // pred_check
      _
    $region27: #{tpu_custom_call.1} parent=1 // pred_check_branch
      %67 = sbr.rel (0) target = $region29
    $region28: #{tpu_custom_call.1} parent=1 // pred_region
      _
    $region29: #{tpu_custom_call.1} parent=1 // pred_fallthru
      _
    // Predicated region
    $region30: #{tpu_custom_call.1} parent=1 // pred_check
      _
    $region31: #{tpu_custom_call.1} parent=1 // pred_check_branch
      %69 = sbr.rel (0) target = $region33
    $region32: #{tpu_custom_call.1} parent=1 // pred_region
      %71 = vsyncadd [#allocation9], 0
      %s72 = sshll.u32 %s7, 4
      %s73 = int_to_ptr.hbm [resolvable:$true] %s72
      %s74 = sshll.u32 [#allocation8], 4
      %s75 = int_to_ptr.vmem [resolvable:$true] %s74
      %80 = dma.hbm_to_vmem [thread:$0]  %s73, 2048, %s75, [#allocation9], 128, 128, 8
    $region33: #{tpu_custom_call.1} parent=1 // pred_fallthru
      _
    // Predicated region
    $region34: #{tpu_custom_call.1} parent=1 // pred_check
      _
    $region35: #{tpu_custom_call.1} parent=1 // pred_check_branch
      %82 = sbr.rel (0) target = $region37
    $region36: #{tpu_custom_call.1} parent=1 // pred_region
      _
    $region37: #{tpu_custom_call.1} parent=1 // pred_fallthru
      _
    // Predicated region
    $region38: #{tpu_custom_call.1} parent=1 // pred_check
      _
    $region39: #{tpu_custom_call.1} parent=1 // pred_check_branch
      %84 = sbr.rel (0) target = $region41
    $region40: #{tpu_custom_call.1} parent=1 // pred_region
      _
    $region41: #{tpu_custom_call.1} parent=1 // pred_fallthru
      _
    // Predicated region
    $region42: #{tpu_custom_call.1} parent=1 // pred_check
      _
    $region43: #{tpu_custom_call.1} parent=1 // pred_check_branch
      %86 = sbr.rel (0) target = $region45
    $region44: #{tpu_custom_call.1} parent=1 // pred_region
      _
    $region45: #{tpu_custom_call.1} parent=1 // pred_fallthru
      _
    // Predicated region
    $region46: #{tpu_custom_call.1} parent=1 // pred_check
      _
    $region47: #{tpu_custom_call.1} parent=1 // pred_check_branch
      %88 = sbr.rel (0) target = $region49
    $region48: #{tpu_custom_call.1} parent=1 // pred_region
      _
    $region49: #{tpu_custom_call.1} parent=1 // pred_fallthru
      _
    // Predicated region
    $region50: #{tpu_custom_call.1} parent=1 // pred_check
      _
    $region51: #{tpu_custom_call.1} parent=1 // pred_check_branch
      %90 = sbr.rel (0) target = $region53
    $region52: #{tpu_custom_call.1} parent=1 // pred_region
      %92 = dma.done [#allocation3], 2048
    $region53: #{tpu_custom_call.1} parent=1 // pred_fallthru
      _
    // Predicated region
    $region54: #{tpu_custom_call.1} parent=1 // pred_check
      _
    $region55: #{tpu_custom_call.1} parent=1 // pred_check_branch
      %94 = sbr.rel (0) target = $region57
    $region56: #{tpu_custom_call.1} parent=1 // pred_region
      %96 = dma.done [#allocation6], 256
    $region57: #{tpu_custom_call.1} parent=1 // pred_fallthru
      _
    // Predicated region
    $region58: #{tpu_custom_call.1} parent=1 // pred_check
      _
    $region59: #{tpu_custom_call.1} parent=1 // pred_check_branch
      %98 = sbr.rel (0) target = $region61
    $region60: #{tpu_custom_call.1} parent=1 // pred_region
      %100 = dma.done [#allocation6], 2048
    $region61: #{tpu_custom_call.1} parent=1 // pred_fallthru
      _
    // Predicated region
    $region62: #{tpu_custom_call.1} parent=1 // pred_check
      _
    $region63: #{tpu_custom_call.1} parent=1 // pred_check_branch
      %102 = sbr.rel (0) target = $region65
    $region64: #{tpu_custom_call.1} parent=1 // pred_region
      %104 = dma.done [#allocation9], 2048
    $region65: #{tpu_custom_call.1} parent=1 // pred_fallthru
      _
    %v105 = vld [vmem:[%s0] sm:$0xff]
    %v106 = vld [vmem:[%s0 + $0x8] sm:$0xff]
    %v107 = vld [vmem:[#allocation2] sm:$0xff]
    %v108 = vld [vmem:[#allocation2 + $0x8] sm:$0xff]
    %v109 = vld [vmem:[#allocation2 + $0x10] sm:$0xff]
    %v110 = vld [vmem:[#allocation2 + $0x18] sm:$0xff]
    %v111 = vld [vmem:[#allocation2 + $0x20] sm:$0xff]
    %v112 = vld [vmem:[#allocation2 + $0x28] sm:$0xff]
    %v113 = vld [vmem:[#allocation2 + $0x30] sm:$0xff]
    %v114 = vld [vmem:[#allocation2 + $0x38] sm:$0xff]
    %v115 = vld [vmem:[#allocation2 + $0x40] sm:$0xff]
    %v116 = vld [vmem:[#allocation2 + $0x48] sm:$0xff]
    %v117 = vld [vmem:[#allocation2 + $0x50] sm:$0xff]
    %v118 = vld [vmem:[#allocation2 + $0x58] sm:$0xff]
    %v119 = vld [vmem:[#allocation2 + $0x60] sm:$0xff]
    %v120 = vld [vmem:[#allocation2 + $0x68] sm:$0xff]
    %v121 = vld [vmem:[#allocation2 + $0x70] sm:$0xff]
    %v122 = vld [vmem:[#allocation2 + $0x78] sm:$0xff]
    %v123 = vld [vmem:[%s2] sm:$0x1]
    %v125 = vperm.slane %v123, 0
    %127 = vmatpush.msra.mxu0 %v122
    %128 = vmatpush.msra.mxu0 %v121
    %129 = vmatpush.msra.mxu0 %v120
    %130 = vmatpush.msra.mxu0 %v119
    %131 = vmatpush.msra.mxu0 %v118
    %132 = vmatpush.msra.mxu0 %v117
    %133 = vmatpush.msra.mxu0 %v116
    %134 = vmatpush.msra.mxu0 %v115
    %135 = vmatpush.msra.mxu0 %v114
    %136 = vmatpush.msra.mxu0 %v113
    %137 = vmatpush.msra.mxu0 %v112
    %138 = vmatpush.msra.mxu0 %v111
    %139 = vmatpush.msra.mxu0 %v110
    %140 = vmatpush.msra.mxu0 %v109
    %141 = vmatpush.msra.mxu0 %v108
    %142 = vmatpush.msra.mxu0 %v107
    %143 = vmatmul.f32.gmra.mxu0 %v105
    %v144 = vpop.f32.mrf.mxu0
    %v145 = vadd.f32 %v125, %v144
    %146 = vmatmul.f32.gmra.mxu0 %v106
    %v147 = vpop.f32.mrf.mxu0
    %v148 = vadd.f32 %v125, %v147
    %149 = vdwg.mxu0
    %v150 = vld [vmem:[#allocation5] sm:$0xff]
    %v151 = vld [vmem:[#allocation5 + $0x8] sm:$0xff]
    %v152 = vld [vmem:[%s4] sm:$0xff]
    %v153 = vld [vmem:[%s4 + $0x8] sm:$0xff]
    %155 = vset.pattern.permute.xlu0 0
    %156 = vperm.xlu0 %155, %v152
    %v157 = vpop.permute.xlu0 %156
    %160 = vset.pattern.permute.xlu0 0
    %161 = vperm.xlu0 %160, %v153
    %v162 = vpop.permute.xlu0 %161
    %vm164 = vcmask 130048
    %v166 = vsel %vm164, %v150, 0
    %v169 = vsel %vm164, %v151, 0
    %171 = vmatpush.msra.mxu0 0.0
    %172 = vmatpush.msra.mxu0 0.0
    %173 = vmatpush.msra.mxu0 0.0
    %174 = vmatpush.msra.mxu0 0.0
    %175 = vmatpush.msra.mxu0 0.0
    %176 = vmatpush.msra.mxu0 0.0
    %177 = vmatpush.msra.mxu0 0.0
    %178 = vmatpush.msra.mxu0 0.0
    %179 = vmatpush.msra.mxu0 0.0
    %180 = vmatpush.msra.mxu0 0.0
    %181 = vmatpush.msra.mxu0 0.0
    %182 = vmatpush.msra.mxu0 0.0
    %183 = vmatpush.msra.mxu0 0.0
    %184 = vmatpush.msra.mxu0 0.0
    %185 = vmatpush.msra.mxu0 %v148
    %186 = vmatpush.msra.mxu0 %v145
    %187 = vmatmul.f32.gmra.mxu0 %v166
    %v188 = vpop.f32.mrf.mxu0
    %v189 = vadd.f32 %v157, %v188
    %190 = vmatmul.f32.gmra.mxu0 %v169
    %v191 = vpop.f32.mrf.mxu0
    %v192 = vadd.f32 %v162, %v191
    %193 = vdwg.mxu0
    %v194 = vld [vmem:[#allocation8] sm:$0xff]
    %v195 = vld [vmem:[#allocation8 + $0x8] sm:$0xff]
    %v196 = vld [vmem:[#allocation8 + $0x10] sm:$0xff]
    %v197 = vld [vmem:[#allocation8 + $0x18] sm:$0xff]
    %v198 = vld [vmem:[#allocation8 + $0x20] sm:$0xff]
    %v199 = vld [vmem:[#allocation8 + $0x28] sm:$0xff]
    %v200 = vld [vmem:[#allocation8 + $0x30] sm:$0xff]
    %v201 = vld [vmem:[#allocation8 + $0x38] sm:$0xff]
    %v202 = vld [vmem:[#allocation8 + $0x40] sm:$0xff]
    %v203 = vld [vmem:[#allocation8 + $0x48] sm:$0xff]
    %v204 = vld [vmem:[#allocation8 + $0x50] sm:$0xff]
    %v205 = vld [vmem:[#allocation8 + $0x58] sm:$0xff]
    %v206 = vld [vmem:[#allocation8 + $0x60] sm:$0xff]
    %v207 = vld [vmem:[#allocation8 + $0x68] sm:$0xff]
    %v208 = vld [vmem:[#allocation8 + $0x70] sm:$0xff]
    %v209 = vld [vmem:[#allocation8 + $0x78] sm:$0xff]
    %v210 = vld [vmem:[%s8] sm:$0x1]
    %v211 = vld [vmem:[%s9] sm:$0x1]
    %212 = vmatpush.msra.mxu0 %v209
    %213 = vmatpush.msra.mxu0 %v208
    %214 = vmatpush.msra.mxu0 %v207
    %215 = vmatpush.msra.mxu0 %v206
    %216 = vmatpush.msra.mxu0 %v205
    %217 = vmatpush.msra.mxu0 %v204
    %218 = vmatpush.msra.mxu0 %v203
    %219 = vmatpush.msra.mxu0 %v202
    %220 = vmatpush.msra.mxu0 %v201
    %221 = vmatpush.msra.mxu0 %v200
    %222 = vmatpush.msra.mxu0 %v199
    %223 = vmatpush.msra.mxu0 %v198
    %224 = vmatpush.msra.mxu0 %v197
    %225 = vmatpush.msra.mxu0 %v196
    %226 = vmatpush.msra.mxu0 %v195
    %227 = vmatpush.msra.mxu0 %v194
    %228 = vmatmul.f32.gmra.mxu0 %v189
    %v229 = vpop.f32.mrf.mxu0
    %v230 = vadd.f32 0.0, %v229
    %231 = vmatmul.f32.gmra.mxu0 %v192
    %v232 = vpop.f32.mrf.mxu0
    %v233 = vadd.f32 0.0, %v232
    %234 = vdwg.mxu0
    %v235 = vsub.f32 %v189, %v230
    %v236 = vsub.f32 %v192, %v233
    %v237 = vmul.f32 %v235, %v235
    %v238 = vmul.f32 %v236, %v236
    %239 = vmatpush.msra.mxu0 %v209
    %240 = vmatpush.msra.mxu0 %v208
    %241 = vmatpush.msra.mxu0 %v207
    %242 = vmatpush.msra.mxu0 %v206
    %243 = vmatpush.msra.mxu0 %v205
    %244 = vmatpush.msra.mxu0 %v204
    %245 = vmatpush.msra.mxu0 %v203
    %246 = vmatpush.msra.mxu0 %v202
    %247 = vmatpush.msra.mxu0 %v201
    %248 = vmatpush.msra.mxu0 %v200
    %249 = vmatpush.msra.mxu0 %v199
    %250 = vmatpush.msra.mxu0 %v198
    %251 = vmatpush.msra.mxu0 %v197
    %252 = vmatpush.msra.mxu0 %v196
    %253 = vmatpush.msra.mxu0 %v195
    %254 = vmatpush.msra.mxu0 %v194
    %255 = vmatmul.f32.gmra.mxu0 %v237
    %v256 = vpop.f32.mrf.mxu0
    %v257 = vadd.f32 1e-05, %v256
    %258 = vmatmul.f32.gmra.mxu0 %v238
    %v259 = vpop.f32.mrf.mxu0
    %v260 = vadd.f32 1e-05, %v259
    %261 = vdwg.mxu0
    %v262 = vrsqrt.pop %v257
    %v263 = vmul.f32 %v262, %v257
    %v264 = vmul.f32 %v263, %v262
    %v265 = vmul.f32 0.5, %v264
    %v266 = vsub.f32 1.5, %v265
    %v267 = vmul.f32 %v262, %v266
    %vm268 = vweird.f32 %v257
    %vm269 = vweird.f32 %v262
    %vm270 = vmor %vm268, %vm269
    %v271 = vsel %vm270, %v262, %v267
    %v272 = vrsqrt.pop %v260
    %v273 = vmul.f32 %v272, %v260
    %v274 = vmul.f32 %v273, %v272
    %v275 = vmul.f32 0.5, %v274
    %v276 = vsub.f32 1.5, %v275
    %v277 = vmul.f32 %v272, %v276
    %vm278 = vweird.f32 %v260
    %vm279 = vweird.f32 %v272
    %vm280 = vmor %vm278, %vm279
    %v281 = vsel %vm280, %v272, %v277
    %v282 = vmul.f32 %v235, %v271
    %v283 = vmul.f32 %v236, %v281
    %v285 = vperm.slane %v210, 0
    %v287 = vmul.f32 %v282, %v285
    %v288 = vmul.f32 %v283, %v285
    %v290 = vperm.slane %v211, 0
    %v292 = vadd.f32 %v287, %v290
    %v293 = vadd.f32 %v288, %v290
    %v294 = vld [vmem:[#allocation7] sm:$0xff]
    %v295 = vld [vmem:[#allocation7 + $0x8] sm:$0xff]
    %v296 = vld [vmem:[#allocation7 + $0x10] sm:$0xff]
    %v297 = vld [vmem:[#allocation7 + $0x18] sm:$0xff]
    %v298 = vld [vmem:[#allocation7 + $0x20] sm:$0xff]
    %v299 = vld [vmem:[#allocation7 + $0x28] sm:$0xff]
    %v300 = vld [vmem:[#allocation7 + $0x30] sm:$0xff]
    %v301 = vld [vmem:[#allocation7 + $0x38] sm:$0xff]
    %v302 = vld [vmem:[#allocation7 + $0x40] sm:$0xff]
    %v303 = vld [vmem:[#allocation7 + $0x48] sm:$0xff]
    %v304 = vld [vmem:[#allocation7 + $0x50] sm:$0xff]
    %v305 = vld [vmem:[#allocation7 + $0x58] sm:$0xff]
    %v306 = vld [vmem:[#allocation7 + $0x60] sm:$0xff]
    %v307 = vld [vmem:[#allocation7 + $0x68] sm:$0xff]
    %v308 = vld [vmem:[#allocation7 + $0x70] sm:$0xff]
    %v309 = vld [vmem:[#allocation7 + $0x78] sm:$0xff]
    %v310 = vld [vmem:[%s6] sm:$0x1]
    %v312 = vperm.slane %v310, 0
    %314 = vmatpush.msra.mxu0 %v309
    %315 = vmatpush.msra.mxu0 %v308
    %316 = vmatpush.msra.mxu0 %v307
    %317 = vmatpush.msra.mxu0 %v306
    %318 = vmatpush.msra.mxu0 %v305
    %319 = vmatpush.msra.mxu0 %v304
    %320 = vmatpush.msra.mxu0 %v303
    %321 = vmatpush.msra.mxu0 %v302
    %322 = vmatpush.msra.mxu0 %v301
    %323 = vmatpush.msra.mxu0 %v300
    %324 = vmatpush.msra.mxu0 %v299
    %325 = vmatpush.msra.mxu0 %v298
    %326 = vmatpush.msra.mxu0 %v297
    %327 = vmatpush.msra.mxu0 %v296
    %328 = vmatpush.msra.mxu0 %v295
    %329 = vmatpush.msra.mxu0 %v294
    %330 = vmatmul.f32.gmra.mxu0 %v292
    %v331 = vpop.f32.mrf.mxu0
    %v332 = vadd.f32 %v312, %v331
    %333 = vmatmul.f32.gmra.mxu0 %v293
    %v334 = vpop.f32.mrf.mxu0
    %v335 = vadd.f32 %v312, %v334
    %336 = vdwg.mxu0
    %v337 = vmax.f32 %v332, 0.0
    %v338 = vmax.f32 %v335, 0.0
    %v339 = vadd.f32 %v105, %v337
    %v340 = vadd.f32 %v106, %v338
    %v341 = vld [vmem:[%s10] sm:$0x1]
    %v342 = vld [vmem:[%s11] sm:$0x1]
    %343 = vmatpush.msra.mxu0 %v209
    %344 = vmatpush.msra.mxu0 %v208
    %345 = vmatpush.msra.mxu0 %v207
    %346 = vmatpush.msra.mxu0 %v206
    %347 = vmatpush.msra.mxu0 %v205
    %348 = vmatpush.msra.mxu0 %v204
    %349 = vmatpush.msra.mxu0 %v203
    %350 = vmatpush.msra.mxu0 %v202
    %351 = vmatpush.msra.mxu0 %v201
    %352 = vmatpush.msra.mxu0 %v200
    %353 = vmatpush.msra.mxu0 %v199
    %354 = vmatpush.msra.mxu0 %v198
    %355 = vmatpush.msra.mxu0 %v197
    %356 = vmatpush.msra.mxu0 %v196
    %357 = vmatpush.msra.mxu0 %v195
    %358 = vmatpush.msra.mxu0 %v194
    %359 = vmatmul.f32.gmra.mxu0 %v339
    %v360 = vpop.f32.mrf.mxu0
    %v361 = vadd.f32 0.0, %v360
    %362 = vmatmul.f32.gmra.mxu0 %v340
    %v363 = vpop.f32.mrf.mxu0
    %v364 = vadd.f32 0.0, %v363
    %365 = vdwg.mxu0
    %v366 = vsub.f32 %v339, %v361
    %v367 = vsub.f32 %v340, %v364
    %v368 = vmul.f32 %v366, %v366
    %v369 = vmul.f32 %v367, %v367
    %370 = vmatpush.msra.mxu0 %v209
    %371 = vmatpush.msra.mxu0 %v208
    %372 = vmatpush.msra.mxu0 %v207
    %373 = vmatpush.msra.mxu0 %v206
    %374 = vmatpush.msra.mxu0 %v205
    %375 = vmatpush.msra.mxu0 %v204
    %376 = vmatpush.msra.mxu0 %v203
    %377 = vmatpush.msra.mxu0 %v202
    %378 = vmatpush.msra.mxu0 %v201
    %379 = vmatpush.msra.mxu0 %v200
    %380 = vmatpush.msra.mxu0 %v199
    %381 = vmatpush.msra.mxu0 %v198
    %382 = vmatpush.msra.mxu0 %v197
    %383 = vmatpush.msra.mxu0 %v196
    %384 = vmatpush.msra.mxu0 %v195
    %385 = vmatpush.msra.mxu0 %v194
    %386 = vmatmul.f32.gmra.mxu0 %v368
    %v387 = vpop.f32.mrf.mxu0
    %v388 = vadd.f32 1e-05, %v387
    %389 = vmatmul.f32.gmra.mxu0 %v369
    %v390 = vpop.f32.mrf.mxu0
    %v391 = vadd.f32 1e-05, %v390
    %392 = vdwg.mxu0
    %v393 = vrsqrt.pop %v388
    %v394 = vmul.f32 %v393, %v388
    %v395 = vmul.f32 %v394, %v393
    %v396 = vmul.f32 0.5, %v395
    %v397 = vsub.f32 1.5, %v396
    %v398 = vmul.f32 %v393, %v397
    %vm399 = vweird.f32 %v388
    %vm400 = vweird.f32 %v393
    %vm401 = vmor %vm399, %vm400
    %v402 = vsel %vm401, %v393, %v398
    %v403 = vrsqrt.pop %v391
    %v404 = vmul.f32 %v403, %v391
    %v405 = vmul.f32 %v404, %v403
    %v406 = vmul.f32 0.5, %v405
    %v407 = vsub.f32 1.5, %v406
    %v408 = vmul.f32 %v403, %v407
    %vm409 = vweird.f32 %v391
    %vm410 = vweird.f32 %v403
    %vm411 = vmor %vm409, %vm410
    %v412 = vsel %vm411, %v403, %v408
    %v413 = vmul.f32 %v366, %v402
    %v414 = vmul.f32 %v367, %v412
    %v416 = vperm.slane %v341, 0
    %v418 = vmul.f32 %v413, %v416
    %v419 = vmul.f32 %v414, %v416
    %v421 = vperm.slane %v342, 0
    %v423 = vadd.f32 %v418, %v421
    %v424 = vadd.f32 %v419, %v421
    %425 = vst [vmem:[#allocation10] sm:$0xff] %v423
    %426 = vst [vmem:[#allocation10 + $0x8] sm:$0xff] %v424
    // Predicated region
    $region66: #{tpu_custom_call.1} parent=1 // pred_check
      _
    $region67: #{tpu_custom_call.1} parent=1 // pred_check_branch
      %428 = sbr.rel (0) target = $region69
    $region68: #{tpu_custom_call.1} parent=1 // pred_region
      %430 = vsyncadd [#allocation4], 0
      %s431 = sshll.u32 [#allocation10], 4
      %s432 = int_to_ptr.vmem [resolvable:$true] %s431
      %s433 = sshll.u32 %s12, 4
      %s434 = int_to_ptr.hbm [resolvable:$true] %s433
      %439 = dma.vmem_to_hbm [thread:$0]  %s432, 256, %s434, [#allocation4], 128, 128, 8
    $region69: #{tpu_custom_call.1} parent=1 // pred_fallthru
      _
    // Predicated region
    $region70: #{tpu_custom_call.1} parent=1 // pred_check
      _
    $region71: #{tpu_custom_call.1} parent=1 // pred_check_branch
      %441 = sbr.rel (0) target = $region73
    $region72: #{tpu_custom_call.1} parent=1 // pred_region
      %443 = dma.done [#allocation4], 256
    $region73: #{tpu_custom_call.1} parent=1 // pred_fallthru
      _
    %444 = vsyncpa [#allocation3], 1
    %445 = vsyncpa [#allocation6], 1
    %446 = vsyncpa [#allocation9], 1
    %447 = vsyncpa [#allocation4], 1

</llo_original>
